<compile_context>
chip_gen: v7x
topology: tpu7x:2x2x1
jax: 0.10.0
libtpu: 0.0.40
codegen_flags: <defaults>
</compile_context>

<pallas_src>
import functools
import math

import jax
import jax.numpy as jnp
from jax.experimental import pallas as pl
from jax.experimental.pallas import tpu as pltpu

BN_EPS = 1e-5
S_BN = 1.0 / math.sqrt(1.0 + BN_EPS)  # eval-mode BN scale (gamma=1, var=1, mean=0)
LANE = 128


def _round_up(n, m):
    return ((n + m - 1) // m) * m


def _model_kernel(x_ref, w1_ref, w2_ref, w3_ref, wfc_ref, bfc_ref, o_ref,
                  acc_ref, *, inv_t):
    t_idx = pl.program_id(1)

    @pl.when(t_idx == 0)
    def _():
        acc_ref[...] = jnp.zeros_like(acc_ref)

    tb, tt, fp = x_ref.shape
    # 1x1 convs are position-independent -> flatten (batch, time) into M.
    x = x_ref[...].reshape(tb * tt, fp)

    # BN scales are pre-folded into the (transposed, zero-padded) weights.
    h1 = jnp.maximum(
        jnp.dot(x, w1_ref[...], preferred_element_type=jnp.float32), 0.0)
    h2 = jnp.maximum(
        jnp.dot(h1, w2_ref[...], preferred_element_type=jnp.float32), 0.0)
    h3 = jnp.maximum(
        jnp.dot(h2, w3_ref[...], preferred_element_type=jnp.float32), 0.0)

    logits = jnp.dot(h3, wfc_ref[...],
                     preferred_element_type=jnp.float32) + bfc_ref[...]
    probs = jax.nn.sigmoid(logits)                      # exp -> EUP slot

    cp = probs.shape[-1]
    acc_ref[...] += probs.reshape(tb, tt, cp).sum(axis=1)

    @pl.when(t_idx == pl.num_programs(1) - 1)
    def _():
        o_ref[...] = acc_ref[...] * inv_t               # fold 1/T into the store


def decision_level_average_pooling(x, w1, w2, w3, wfc, bfc,
                                   *, tile_b=None, tile_t=None):
    """x: (B, T, F) f32.  w*: PyTorch-layout (out, in).  Returns (B, C) f32."""
    B, T, Fb = x.shape
    H = w1.shape[0]
    C = wfc.shape[0]

    # Pad feature dims to the 128-lane width (dense vregs, unmasked stores).
    Fp = _round_up(Fb, LANE)
    Hp = _round_up(H, LANE)
    Cp = _round_up(C, LANE)

    # Fold eval-mode BN scales into the transposed, zero-padded weights:
    #   bn0 (before conv1) + bn1 (after conv1) -> S_BN**2 on W1
    #   bn2 / bn3                              -> S_BN on W2 / W3
    w1t = jnp.zeros((Fp, Hp), jnp.float32).at[:Fb, :H].set(w1.T * (S_BN * S_BN))
    w2t = jnp.zeros((Hp, Hp), jnp.float32).at[:H, :H].set(w2.T * S_BN)
    w3t = jnp.zeros((Hp, Hp), jnp.float32).at[:H, :H].set(w3.T * S_BN)
    wfct = jnp.zeros((Hp, Cp), jnp.float32).at[:H, :C].set(wfc.T)
    bfcp = jnp.zeros((1, Cp), jnp.float32).at[0, :C].set(bfc)

    xp = jnp.zeros((B, T, Fp), jnp.float32).at[:, :, :Fb].set(x)

    # Tile choice: at the toy sizes this is a single grid step; for large T
    # cap tile_t so double-buffered activations fit v7x's smaller VMEM.
    tb = tile_b if tile_b is not None else B
    tt = tile_t if tile_t is not None else min(T, 256)
    assert B % tb == 0 and T % tt == 0, "tiles must divide B and T"
    grid = (B // tb, T // tt)

    grid_spec = pltpu.PrefetchScalarGridSpec(
        num_scalar_prefetch=0,
        grid=grid,
        in_specs=[
            pl.BlockSpec((tb, tt, Fp), lambda b, t: (b, t, 0)),
            pl.BlockSpec((Fp, Hp), lambda b, t: (0, 0)),
            pl.BlockSpec((Hp, Hp), lambda b, t: (0, 0)),
            pl.BlockSpec((Hp, Hp), lambda b, t: (0, 0)),
            pl.BlockSpec((Hp, Cp), lambda b, t: (0, 0)),
            pl.BlockSpec((1, Cp), lambda b, t: (0, 0)),
        ],
        out_specs=pl.BlockSpec((tb, Cp), lambda b, t: (b, 0)),
        scratch_shapes=[pltpu.VMEM((tb, Cp), jnp.float32)],
    )

    out_padded = pl.pallas_call(
        functools.partial(_model_kernel, inv_t=1.0 / T),
        out_shape=jax.ShapeDtypeStruct((B, Cp), jnp.float32),
        grid_spec=grid_spec,
        compiler_params=pltpu.CompilerParams(
            dimension_semantics=("parallel", "arbitrary")),
    )(xp, w1t, w2t, w3t, wfct, bfcp)

    return out_padded[:, :C]


def _init_layer_weight(key, n_out, n_in):
    """Mimics init_layer: uniform(-scale, scale), scale = sqrt(2/n_in)*sqrt(3)."""
    scale = math.sqrt(2.0 / n_in) * math.sqrt(3.0)
    return jax.random.uniform(
        key, (n_out, n_in), dtype=jnp.float32, minval=-scale, maxval=scale)


def _reference(x, w1, w2, w3, wfc, bfc):
    a0 = x * S_BN
    h1 = jnp.maximum((a0 @ w1.T) * S_BN, 0.0)
    h2 = jnp.maximum((h1 @ w2.T) * S_BN, 0.0)
    h3 = jnp.maximum((h2 @ w3.T) * S_BN, 0.0)
    p = jax.nn.sigmoid(h3 @ wfc.T + bfc)
    return jnp.mean(p, axis=1)


if __name__ == "__main__":
    # Small shapes: batch=2, time_steps=8, freq_bins=16, hidden=32, classes=10
    B, T, FREQ, H, C = 2, 8, 16, 32, 10

    key = jax.random.PRNGKey(0)
    kx, k1, k2, k3, kfc = jax.random.split(key, 5)

    # input: (samples_num, time_steps, freq_bins) as consumed by EmbeddingLayers
    x = jax.random.normal(kx, (B, T, FREQ), dtype=jnp.float32)

    # conv weights (1x1 convs == dense over channel dim), stored (out, in).
    w1 = _init_layer_weight(k1, H, FREQ)        # conv1: fan_in = FREQ*1*1
    w2 = _init_layer_weight(k2, H, H)           # conv2
    w3 = _init_layer_weight(k3, H, H)           # conv3
    wfc = _init_layer_weight(kfc, C, H)         # fc_final weight
    bfc = jnp.zeros((C,), dtype=jnp.float32)    # fc_final bias (init to 0)

    out = decision_level_average_pooling(x, w1, w2, w3, wfc, bfc)
    out = jax.block_until_ready(out)

    ref = _reference(x, w1, w2, w3, wfc, bfc)
    assert out.shape == (B, C)
    assert jnp.allclose(out, ref, rtol=1e-4, atol=2e-5), "mismatch vs reference"

    print("KERNEL_OK")
</pallas_src>

<mosaic_0001>
module attributes {stable_mosaic.version = 11 : i64} {
  func.func @_model_kernel(%arg0: i32, %arg1: i32, %arg2: memref<2x8x128xf32, #tpu.memory_space<vmem>>, %arg3: memref<128x128xf32, #tpu.memory_space<vmem>>, %arg4: memref<128x128xf32, #tpu.memory_space<vmem>>, %arg5: memref<128x128xf32, #tpu.memory_space<vmem>>, %arg6: memref<128x128xf32, #tpu.memory_space<vmem>>, %arg7: memref<1x128xf32, #tpu.memory_space<vmem>>, %arg8: memref<2x128xf32, #tpu.memory_space<vmem>>, %arg9: memref<2x128xf32, #tpu.memory_space<vmem>>) attributes {dimension_semantics = [#tpu.dimension_semantics<parallel>, #tpu.dimension_semantics<arbitrary>], iteration_bounds = array<i64: 1, 1>, scalar_prefetch = 0 : i64, scratch_operands = 1 : i64, tpu.core_type = #tpu.core_type<tc>, window_params = [{transform_indices = @transform_0, window_bounds = array<i64: 2, 8, 128>}, {pipeline_mode = #tpu.pipeline_mode<synchronous>, transform_indices = @transform_1, window_bounds = array<i64: 128, 128>}, {pipeline_mode = #tpu.pipeline_mode<synchronous>, transform_indices = @transform_2, window_bounds = array<i64: 128, 128>}, {pipeline_mode = #tpu.pipeline_mode<synchronous>, transform_indices = @transform_3, window_bounds = array<i64: 128, 128>}, {pipeline_mode = #tpu.pipeline_mode<synchronous>, transform_indices = @transform_4, window_bounds = array<i64: 128, 128>}, {pipeline_mode = #tpu.pipeline_mode<synchronous>, transform_indices = @transform_5, window_bounds = array<i64: 1, 128>}, {transform_indices = @transform_6, window_bounds = array<i64: 2, 128>}]} {
    %c0_i32 = arith.constant 0 : i32
    %0 = arith.cmpi eq, %arg1, %c0_i32 : i32
    %1 = arith.extui %0 : i1 to i32
    %c0_i32_0 = arith.constant 0 : i32
    %2 = arith.cmpi ne, %1, %c0_i32_0 : i32
    scf.if %2 {
      %cst_27 = arith.constant 0.000000e+00 : f32
      %35 = vector.broadcast %cst_27 : f32 to vector<2x128xf32>
      %c0_28 = arith.constant 0 : index
      %c0_29 = arith.constant 0 : index
      %36 = vector.load %arg9[%c0_28, %c0_29] : memref<2x128xf32, #tpu.memory_space<vmem>>, vector<2x128xf32>
      tpu.vector_store %arg9[%c0_28, %c0_29], %35 {strides = array<i32>} : memref<2x128xf32, #tpu.memory_space<vmem>>, vector<2x128xf32>,
    } else {
    }
    %c0 = arith.constant 0 : index
    %c0_1 = arith.constant 0 : index
    %c0_2 = arith.constant 0 : index
    %3 = vector.load %arg2[%c0, %c0_1, %c0_2] : memref<2x8x128xf32, #tpu.memory_space<vmem>>, vector<2x8x128xf32>
    %4 = vector.shape_cast %3 : vector<2x8x128xf32> to vector<16x128xf32>
    %c0_3 = arith.constant 0 : index
    %c0_4 = arith.constant 0 : index
    %5 = vector.load %arg3[%c0_3, %c0_4] : memref<128x128xf32, #tpu.memory_space<vmem>>, vector<128x128xf32>
    %cst = arith.constant dense<0.000000e+00> : vector<16x128xf32>
    %6 = tpu.matmul %4, %5, %cst {dimension_numbers = #tpu.dot_dimension_numbers<[1], [0], [0], [1], [0, 0, 1, 1], [], []>} : vector<16x128xf32>, vector<128x128xf32>, vector<16x128xf32> -> vector<16x128xf32>
    %cst_5 = arith.constant 0.000000e+00 : f32
    %7 = vector.broadcast %cst_5 : f32 to vector<16x128xf32>
    %8 = arith.maximumf %6, %7 : vector<16x128xf32>
    %c0_6 = arith.constant 0 : index
    %c0_7 = arith.constant 0 : index
    %9 = vector.load %arg4[%c0_6, %c0_7] : memref<128x128xf32, #tpu.memory_space<vmem>>, vector<128x128xf32>
    %cst_8 = arith.constant dense<0.000000e+00> : vector<16x128xf32>
    %10 = tpu.matmul %8, %9, %cst_8 {dimension_numbers = #tpu.dot_dimension_numbers<[1], [0], [0], [1], [0, 0, 1, 1], [], []>} : vector<16x128xf32>, vector<128x128xf32>, vector<16x128xf32> -> vector<16x128xf32>
    %cst_9 = arith.constant 0.000000e+00 : f32
    %11 = vector.broadcast %cst_9 : f32 to vector<16x128xf32>
    %12 = arith.maximumf %10, %11 : vector<16x128xf32>
    %c0_10 = arith.constant 0 : index
    %c0_11 = arith.constant 0 : index
    %13 = vector.load %arg5[%c0_10, %c0_11] : memref<128x128xf32, #tpu.memory_space<vmem>>, vector<128x128xf32>
    %cst_12 = arith.constant dense<0.000000e+00> : vector<16x128xf32>
    %14 = tpu.matmul %12, %13, %cst_12 {dimension_numbers = #tpu.dot_dimension_numbers<[1], [0], [0], [1], [0, 0, 1, 1], [], []>} : vector<16x128xf32>, vector<128x128xf32>, vector<16x128xf32> -> vector<16x128xf32>
    %cst_13 = arith.constant 0.000000e+00 : f32
    %15 = vector.broadcast %cst_13 : f32 to vector<16x128xf32>
    %16 = arith.maximumf %14, %15 : vector<16x128xf32>
    %c0_14 = arith.constant 0 : index
    %c0_15 = arith.constant 0 : index
    %17 = vector.load %arg6[%c0_14, %c0_15] : memref<128x128xf32, #tpu.memory_space<vmem>>, vector<128x128xf32>
    %cst_16 = arith.constant dense<0.000000e+00> : vector<16x128xf32>
    %18 = tpu.matmul %16, %17, %cst_16 {dimension_numbers = #tpu.dot_dimension_numbers<[1], [0], [0], [1], [0, 0, 1, 1], [], []>} : vector<16x128xf32>, vector<128x128xf32>, vector<16x128xf32> -> vector<16x128xf32>
    %c0_17 = arith.constant 0 : index
    %c0_18 = arith.constant 0 : index
    %19 = vector.load %arg7[%c0_17, %c0_18] : memref<1x128xf32, #tpu.memory_space<vmem>>, vector<1x128xf32>
    %20 = vector.broadcast %19 : vector<1x128xf32> to vector<16x128xf32>
    %21 = arith.addf %18, %20 : vector<16x128xf32>
    %22 = arith.negf %21 : vector<16x128xf32>
    %23 = math.exp %22 : vector<16x128xf32>
    %cst_19 = arith.constant 1.000000e+00 : f32
    %24 = vector.broadcast %cst_19 : f32 to vector<16x128xf32>
    %25 = arith.addf %24, %23 : vector<16x128xf32>
    %26 = arith.divf %24, %25 : vector<16x128xf32>
    %c0_20 = arith.constant 0 : index
    %c0_21 = arith.constant 0 : index
    %27 = vector.load %arg9[%c0_20, %c0_21] : memref<2x128xf32, #tpu.memory_space<vmem>>, vector<2x128xf32>
    %28 = vector.shape_cast %26 : vector<16x128xf32> to vector<2x8x128xf32>
    %cst_22 = arith.constant dense<0.000000e+00> : vector<2x128xf32>
    %29 = vector.multi_reduction <add>, %28, %cst_22 [1] : vector<2x8x128xf32> to vector<2x128xf32>
    %30 = arith.addf %27, %29 : vector<2x128xf32>
    %c0_23 = arith.constant 0 : index
    %c0_24 = arith.constant 0 : index
    %31 = vector.load %arg9[%c0_23, %c0_24] : memref<2x128xf32, #tpu.memory_space<vmem>>, vector<2x128xf32>
    tpu.vector_store %arg9[%c0_23, %c0_24], %30 {strides = array<i32>} : memref<2x128xf32, #tpu.memory_space<vmem>>, vector<2x128xf32>,
    %c0_i32_25 = arith.constant 0 : i32
    %32 = arith.cmpi eq, %arg1, %c0_i32_25 : i32
    %33 = arith.extui %32 : i1 to i32
    %c0_i32_26 = arith.constant 0 : i32
    %34 = arith.cmpi ne, %33, %c0_i32_26 : i32
    scf.if %34 {
      %c0_27 = arith.constant 0 : index
      %c0_28 = arith.constant 0 : index
      %35 = vector.load %arg9[%c0_27, %c0_28] : memref<2x128xf32, #tpu.memory_space<vmem>>, vector<2x128xf32>
      %cst_29 = arith.constant 1.250000e-01 : f32
      %36 = vector.broadcast %cst_29 : f32 to vector<2x128xf32>
      %37 = arith.mulf %35, %36 : vector<2x128xf32>
      %c0_30 = arith.constant 0 : index
      %c0_31 = arith.constant 0 : index
      %38 = vector.load %arg8[%c0_30, %c0_31] : memref<2x128xf32, #tpu.memory_space<vmem>>, vector<2x128xf32>
      tpu.vector_store %arg8[%c0_30, %c0_31], %37 {strides = array<i32>} : memref<2x128xf32, #tpu.memory_space<vmem>>, vector<2x128xf32>,
    } else {
    }
    return
  }
  func.func @transform_0(%arg0: i32, %arg1: i32) -> (i32, i32, i32) {
    %c0_i32 = arith.constant 0 : i32
    %c0_i32_0 = arith.constant 0 : i32
    return %arg0, %arg1, %c0_i32 : i32, i32, i32
  }
  func.func @transform_1(%arg0: i32, %arg1: i32) -> (i32, i32) {
    %c0_i32 = arith.constant 0 : i32
    %c0_i32_0 = arith.constant 0 : i32
    %c0_i32_1 = arith.constant 0 : i32
    return %c0_i32, %c0_i32_0 : i32, i32
  }
  func.func @transform_2(%arg0: i32, %arg1: i32) -> (i32, i32) {
    %c0_i32 = arith.constant 0 : i32
    %c0_i32_0 = arith.constant 0 : i32
    %c0_i32_1 = arith.constant 0 : i32
    return %c0_i32, %c0_i32_0 : i32, i32
  }
  func.func @transform_3(%arg0: i32, %arg1: i32) -> (i32, i32) {
    %c0_i32 = arith.constant 0 : i32
    %c0_i32_0 = arith.constant 0 : i32
    %c0_i32_1 = arith.constant 0 : i32
    return %c0_i32, %c0_i32_0 : i32, i32
  }
  func.func @transform_4(%arg0: i32, %arg1: i32) -> (i32, i32) {
    %c0_i32 = arith.constant 0 : i32
    %c0_i32_0 = arith.constant 0 : i32
    %c0_i32_1 = arith.constant 0 : i32
    return %c0_i32, %c0_i32_0 : i32, i32
  }
  func.func @transform_5(%arg0: i32, %arg1: i32) -> (i32, i32) {
    %c0_i32 = arith.constant 0 : i32
    %c0_i32_0 = arith.constant 0 : i32
    %c0_i32_1 = arith.constant 0 : i32
    return %c0_i32, %c0_i32_0 : i32, i32
  }
  func.func @transform_6(%arg0: i32, %arg1: i32) -> (i32, i32) {
    %c0_i32 = arith.constant 0 : i32
    %c0_i32_0 = arith.constant 0 : i32
    return %arg0, %c0_i32 : i32, i32
  }
}

</mosaic_0001>

<llo_original>
// kernel: tpu_custom_call.1
$region0: #{tpu_custom_call.1}
  #allocation0 [shape = 'u32[]', space=smem, size = 0x4, offset = 0x4, fixed_abs, tag = 'smem constant byte address 0x4 - core index']
  #allocation1 [shape = 'u32[144,128]{1,0:T(1,128)}', space=vmem, size = 0x12000, scoped, tag = 'internal scratch']
  #allocation2 [shape = 'f32[2,128]{1,0:T(2,128)}', space=vmem, size = 0x400, scoped, tag = 'scratch operand']
  %s0 = inlined_call_operand.hbm [shape: f32[2,8,128], index: 0, kind: input, shape index: {}]
  %s1 = inlined_call_operand.hbm [shape: f32[128,128], index: 1, kind: input, shape index: {}]
  %s2 = inlined_call_operand.hbm [shape: f32[128,128], index: 2, kind: input, shape index: {}]
  %s3 = inlined_call_operand.hbm [shape: f32[128,128], index: 3, kind: input, shape index: {}]
  %s4 = inlined_call_operand.hbm [shape: f32[128,128], index: 4, kind: input, shape index: {}]
  %s5 = inlined_call_operand.vmem [shape: f32[1,128], index: 5, kind: input, shape index: {}]
  %s6 = inlined_call_operand.hbm [shape: f32[2,128], index: 6, kind: output, shape index: {}]
  %s7 = sld [smem:[#allocation0]]
  $region62: #{tpu_custom_call.1} parent=0
    _
  %s9 = ssub.s32 1, %s7
  %s10 = scalar_select 0, %s9, %s7
  $region1: #{tpu_custom_call.1} parent=0
    #allocation3 [shape = 'u8[8192]{0}', space=vmem, size = 0x2000, scoped, tag = 'input window, operand 0, single buffered']
    #allocation4 [shape = 's32[1]{0}', space=sflag, size = 0x4, scoped, tag = 'scoped memory for tpu_custom_call.1']
    #allocation5 [shape = 's32[1]{0}', space=sflag, size = 0x4, scoped, tag = 'scoped memory for tpu_custom_call.1']
    #allocation6 [shape = 'u8[65536]{0}', space=vmem, size = 0x10000, scoped, tag = 'input window, operand 1, single buffered']
    #allocation7 [shape = 's32[1]{0}', space=sflag, size = 0x4, scoped, tag = 'scoped memory for tpu_custom_call.1']
    #allocation8 [shape = 'u8[65536]{0}', space=vmem, size = 0x10000, scoped, tag = 'input window, operand 2, single buffered']
    #allocation9 [shape = 'u8[65536]{0}', space=vmem, size = 0x10000, scoped, tag = 'input window, operand 3, single buffered']
    #allocation10 [shape = 's32[1]{0}', space=sflag, size = 0x4, scoped, tag = 'scoped memory for tpu_custom_call.1']
    #allocation11 [shape = 'u8[65536]{0}', space=vmem, size = 0x10000, scoped, tag = 'input window, operand 4, single buffered']
    #allocation12 [shape = 'u8[1024]{0}', space=vmem, size = 0x400, scoped, tag = 'output window, operand 0, single buffered']
    %11 = vsyncpa [#allocation4], 0
    %12 = vsyncpa [#allocation7], 0
    %13 = vsyncpa [#allocation10], 0
    %14 = vsyncpa [#allocation5], 0
    // Predicated region
    $region2: #{tpu_custom_call.1} parent=1 // pred_check
      _
    $region3: #{tpu_custom_call.1} parent=1 // pred_check_branch
      %16 = sbr.rel (0) target = $region5
    $region4: #{tpu_custom_call.1} parent=1 // pred_region
      %s18 = ssub.s32 256, 256
      %19 = vsyncadd [#allocation4], %s18
      %s20 = sshll.u32 [#allocation3], 4
      %s21 = int_to_ptr.vmem [resolvable:$true] %s20
      %26 = dma.hbm_to_vmem [thread:$0]  %s0, 256, %s21, [#allocation4], 128, 128, 8
    $region5: #{tpu_custom_call.1} parent=1 // pred_fallthru
      _
    // Predicated region
    $region6: #{tpu_custom_call.1} parent=1 // pred_check
      _
    $region7: #{tpu_custom_call.1} parent=1 // pred_check_branch
      %28 = sbr.rel (0) target = $region9
    $region8: #{tpu_custom_call.1} parent=1 // pred_region
      %s30 = ssub.s32 2048, 2048
      %31 = vsyncadd [#allocation7], %s30
      %s32 = sshll.u32 [#allocation6], 4
      %s33 = int_to_ptr.vmem [resolvable:$true] %s32
      %38 = dma.hbm_to_vmem [thread:$0]  %s1, 2048, %s33, [#allocation7], 128, 128, 8
    $region9: #{tpu_custom_call.1} parent=1 // pred_fallthru
      _
    // Predicated region
    $region10: #{tpu_custom_call.1} parent=1 // pred_check
      _
    $region11: #{tpu_custom_call.1} parent=1 // pred_check_branch
      %40 = sbr.rel (0) target = $region13
    $region12: #{tpu_custom_call.1} parent=1 // pred_region
      %s42 = ssub.s32 2048, 2048
      %43 = vsyncadd [#allocation7], %s42
      %s44 = sshll.u32 [#allocation8], 4
      %s45 = int_to_ptr.vmem [resolvable:$true] %s44
      %50 = dma.hbm_to_vmem [thread:$0]  %s2, 2048, %s45, [#allocation7], 128, 128, 8
    $region13: #{tpu_custom_call.1} parent=1 // pred_fallthru
      _
    // Predicated region
    $region14: #{tpu_custom_call.1} parent=1 // pred_check
      _
    $region15: #{tpu_custom_call.1} parent=1 // pred_check_branch
      %52 = sbr.rel (0) target = $region17
    $region16: #{tpu_custom_call.1} parent=1 // pred_region
      %s54 = ssub.s32 2048, 2048
      %55 = vsyncadd [#allocation10], %s54
      %s56 = sshll.u32 [#allocation9], 4
      %s57 = int_to_ptr.vmem [resolvable:$true] %s56
      %62 = dma.hbm_to_vmem [thread:$0]  %s3, 2048, %s57, [#allocation10], 128, 128, 8
    $region17: #{tpu_custom_call.1} parent=1 // pred_fallthru
      _
    // Predicated region
    $region18: #{tpu_custom_call.1} parent=1 // pred_check
      _
    $region19: #{tpu_custom_call.1} parent=1 // pred_check_branch
      %64 = sbr.rel (0) target = $region21
    $region20: #{tpu_custom_call.1} parent=1 // pred_region
      %s66 = ssub.s32 2048, 2048
      %67 = vsyncadd [#allocation10], %s66
      %s68 = sshll.u32 [#allocation11], 4
      %s69 = int_to_ptr.vmem [resolvable:$true] %s68
      %74 = dma.hbm_to_vmem [thread:$0]  %s4, 2048, %s69, [#allocation10], 128, 128, 8
    $region21: #{tpu_custom_call.1} parent=1 // pred_fallthru
      _
    // Predicated region
    $region22: #{tpu_custom_call.1} parent=1 // pred_check
      _
    $region23: #{tpu_custom_call.1} parent=1 // pred_check_branch
      %76 = sbr.rel (0) target = $region25
    $region24: #{tpu_custom_call.1} parent=1 // pred_region
      _
    $region25: #{tpu_custom_call.1} parent=1 // pred_fallthru
      _
    // Predicated region
    $region26: #{tpu_custom_call.1} parent=1 // pred_check
      _
    $region27: #{tpu_custom_call.1} parent=1 // pred_check_branch
      %78 = sbr.rel (0) target = $region29
    $region28: #{tpu_custom_call.1} parent=1 // pred_region
      %79 = dma.done [#allocation4], 256
    $region29: #{tpu_custom_call.1} parent=1 // pred_fallthru
      _
    // Predicated region
    $region30: #{tpu_custom_call.1} parent=1 // pred_check
      _
    $region31: #{tpu_custom_call.1} parent=1 // pred_check_branch
      %81 = sbr.rel (0) target = $region33
    $region32: #{tpu_custom_call.1} parent=1 // pred_region
      %82 = dma.done [#allocation7], 2048
    $region33: #{tpu_custom_call.1} parent=1 // pred_fallthru
      _
    // Predicated region
    $region34: #{tpu_custom_call.1} parent=1 // pred_check
      _
    $region35: #{tpu_custom_call.1} parent=1 // pred_check_branch
      %84 = sbr.rel (0) target = $region37
    $region36: #{tpu_custom_call.1} parent=1 // pred_region
      %85 = dma.done [#allocation7], 2048
    $region37: #{tpu_custom_call.1} parent=1 // pred_fallthru
      _
    // Predicated region
    $region38: #{tpu_custom_call.1} parent=1 // pred_check
      _
    $region39: #{tpu_custom_call.1} parent=1 // pred_check_branch
      %87 = sbr.rel (0) target = $region41
    $region40: #{tpu_custom_call.1} parent=1 // pred_region
      %88 = dma.done [#allocation10], 2048
    $region41: #{tpu_custom_call.1} parent=1 // pred_fallthru
      _
    // Predicated region
    $region42: #{tpu_custom_call.1} parent=1 // pred_check
      _
    $region43: #{tpu_custom_call.1} parent=1 // pred_check_branch
      %90 = sbr.rel (0) target = $region45
    $region44: #{tpu_custom_call.1} parent=1 // pred_region
      %91 = dma.done [#allocation10], 2048
    $region45: #{tpu_custom_call.1} parent=1 // pred_fallthru
      _
    %p92 = scmp.eq.s32.totalorder 0, 0
    // Predicated region
    $region46: #{tpu_custom_call.1} parent=1 // pred_check
      %p93 = pneg %p92
    $region47: #{tpu_custom_call.1} parent=1 // pred_check_branch
      %95 = sbr.rel (%p93) target = $region49
    $region48: #{tpu_custom_call.1} parent=1 // pred_region
      %96 = vst [vmem:[#allocation2] sm:$0x3] 0.0
    $region49: #{tpu_custom_call.1} parent=1 // pred_fallthru
      _
    %v97 = vld [vmem:[#allocation3] sm:$0xff]
    %v98 = vld [vmem:[#allocation3 + $0x8] sm:$0xff]
    %v99 = vld [vmem:[#allocation6] sm:$0xff]
    %v100 = vld [vmem:[#allocation6 + $0x8] sm:$0xff]
    %v101 = vld [vmem:[#allocation6 + $0x10] sm:$0xff]
    %v102 = vld [vmem:[#allocation6 + $0x18] sm:$0xff]
    %v103 = vld [vmem:[#allocation6 + $0x20] sm:$0xff]
    %v104 = vld [vmem:[#allocation6 + $0x28] sm:$0xff]
    %v105 = vld [vmem:[#allocation6 + $0x30] sm:$0xff]
    %v106 = vld [vmem:[#allocation6 + $0x38] sm:$0xff]
    %v107 = vld [vmem:[#allocation6 + $0x40] sm:$0xff]
    %v108 = vld [vmem:[#allocation6 + $0x48] sm:$0xff]
    %v109 = vld [vmem:[#allocation6 + $0x50] sm:$0xff]
    %v110 = vld [vmem:[#allocation6 + $0x58] sm:$0xff]
    %v111 = vld [vmem:[#allocation6 + $0x60] sm:$0xff]
    %v112 = vld [vmem:[#allocation6 + $0x68] sm:$0xff]
    %v113 = vld [vmem:[#allocation6 + $0x70] sm:$0xff]
    %v114 = vld [vmem:[#allocation6 + $0x78] sm:$0xff]
    %115 = vmatprep.subr.mxu0 0.0
    %116 = vmatpush1.msra.mxu0 %v99
    %117 = vmatprep.subr.mxu0 0.0
    %118 = vmatpush1.msra.mxu0 %v100
    %119 = vmatprep.subr.mxu0 0.0
    %120 = vmatpush1.msra.mxu0 %v101
    %121 = vmatprep.subr.mxu0 0.0
    %122 = vmatpush1.msra.mxu0 %v102
    %123 = vmatprep.subr.mxu0 0.0
    %124 = vmatpush1.msra.mxu0 %v103
    %125 = vmatprep.subr.mxu0 0.0
    %126 = vmatpush1.msra.mxu0 %v104
    %127 = vmatprep.subr.mxu0 0.0
    %128 = vmatpush1.msra.mxu0 %v105
    %129 = vmatprep.subr.mxu0 0.0
    %130 = vmatpush1.msra.mxu0 %v106
    %131 = vmatprep.subr.mxu0 0.0
    %132 = vmatpush1.msra.mxu0 %v107
    %133 = vmatprep.subr.mxu0 0.0
    %134 = vmatpush1.msra.mxu0 %v108
    %135 = vmatprep.subr.mxu0 0.0
    %136 = vmatpush1.msra.mxu0 %v109
    %137 = vmatprep.subr.mxu0 0.0
    %138 = vmatpush1.msra.mxu0 %v110
    %139 = vmatprep.subr.mxu0 0.0
    %140 = vmatpush1.msra.mxu0 %v111
    %141 = vmatprep.subr.mxu0 0.0
    %142 = vmatpush1.msra.mxu0 %v112
    %143 = vmatprep.subr.mxu0 0.0
    %144 = vmatpush1.msra.mxu0 %v113
    %145 = vmatprep.subr.mxu0 0.0
    %146 = vmatpush1.msra.mxu0 %v114
    %147 = vmatprep.subr.mxu0 0.0
    %148 = vmatpush1.msra.mxu0 0.0
    %149 = vmatprep.subr.mxu0 0.0
    %150 = vmatpush1.msra.mxu0 0.0
    %151 = vmatprep.subr.mxu0 0.0
    %152 = vmatpush1.msra.mxu0 0.0
    %153 = vmatprep.subr.mxu0 0.0
    %154 = vmatpush1.msra.mxu0 0.0
    %155 = vmatprep.subr.mxu0 0.0
    %156 = vmatpush1.msra.mxu0 0.0
    %157 = vmatprep.subr.mxu0 0.0
    %158 = vmatpush1.msra.mxu0 0.0
    %159 = vmatprep.subr.mxu0 0.0
    %160 = vmatpush1.msra.mxu0 0.0
    %161 = vmatprep.subr.mxu0 0.0
    %162 = vmatpush1.msra.mxu0 0.0
    %163 = vmatprep.subr.mxu0 0.0
    %164 = vmatpush1.msra.mxu0 0.0
    %165 = vmatprep.subr.mxu0 0.0
    %166 = vmatpush1.msra.mxu0 0.0
    %167 = vmatprep.subr.mxu0 0.0
    %168 = vmatpush1.msra.mxu0 0.0
    %169 = vmatprep.subr.mxu0 0.0
    %170 = vmatpush1.msra.mxu0 0.0
    %171 = vmatprep.subr.mxu0 0.0
    %172 = vmatpush1.msra.mxu0 0.0
    %173 = vmatprep.subr.mxu0 0.0
    %174 = vmatpush1.msra.mxu0 0.0
    %175 = vmatprep.subr.mxu0 0.0
    %176 = vmatpush1.msra.mxu0 0.0
    %177 = vmatprep.subr.mxu0 0.0
    %178 = vmatpush1.msra.mxu0 0.0
    %179 = vmatprep.mubr.f32.mxu0 0.0
    %180 = vmatmul.mubr.f32.gmra.mrb[0].mxu0 %v97
    %v181 = vpop.f32.mrb[0].mxu0
    %v182 = vadd.f32 0.0, %v181
    %v183 = vpop.f32.mrb[0].mxu0
    %184 = vmatprep.mubr.f32.mxu0 0.0
    %185 = vmatmul.mubr.f32.gmra.mrb[0].mxu0 %v98
    %v186 = vpop.f32.mrb[0].mxu0
    %v187 = vadd.f32 0.0, %v186
    %v188 = vpop.f32.mrb[0].mxu0
    %189 = vdwg.mxu0
    %v190 = vmax.f32 %v182, 0.0
    %v191 = vmax.f32 %v187, 0.0
    %v192 = vld [vmem:[#allocation8] sm:$0xff]
    %v193 = vld [vmem:[#allocation8 + $0x8] sm:$0xff]
    %v194 = vld [vmem:[#allocation8 + $0x10] sm:$0xff]
    %v195 = vld [vmem:[#allocation8 + $0x18] sm:$0xff]
    %v196 = vld [vmem:[#allocation8 + $0x20] sm:$0xff]
    %v197 = vld [vmem:[#allocation8 + $0x28] sm:$0xff]
    %v198 = vld [vmem:[#allocation8 + $0x30] sm:$0xff]
    %v199 = vld [vmem:[#allocation8 + $0x38] sm:$0xff]
    %v200 = vld [vmem:[#allocation8 + $0x40] sm:$0xff]
    %v201 = vld [vmem:[#allocation8 + $0x48] sm:$0xff]
    %v202 = vld [vmem:[#allocation8 + $0x50] sm:$0xff]
    %v203 = vld [vmem:[#allocation8 + $0x58] sm:$0xff]
    %v204 = vld [vmem:[#allocation8 + $0x60] sm:$0xff]
    %v205 = vld [vmem:[#allocation8 + $0x68] sm:$0xff]
    %v206 = vld [vmem:[#allocation8 + $0x70] sm:$0xff]
    %v207 = vld [vmem:[#allocation8 + $0x78] sm:$0xff]
    %208 = vmatprep.subr.mxu0 0.0
    %209 = vmatpush1.msra.mxu0 %v192
    %210 = vmatprep.subr.mxu0 0.0
    %211 = vmatpush1.msra.mxu0 %v193
    %212 = vmatprep.subr.mxu0 0.0
    %213 = vmatpush1.msra.mxu0 %v194
    %214 = vmatprep.subr.mxu0 0.0
    %215 = vmatpush1.msra.mxu0 %v195
    %216 = vmatprep.subr.mxu0 0.0
    %217 = vmatpush1.msra.mxu0 %v196
    %218 = vmatprep.subr.mxu0 0.0
    %219 = vmatpush1.msra.mxu0 %v197
    %220 = vmatprep.subr.mxu0 0.0
    %221 = vmatpush1.msra.mxu0 %v198
    %222 = vmatprep.subr.mxu0 0.0
    %223 = vmatpush1.msra.mxu0 %v199
    %224 = vmatprep.subr.mxu0 0.0
    %225 = vmatpush1.msra.mxu0 %v200
    %226 = vmatprep.subr.mxu0 0.0
    %227 = vmatpush1.msra.mxu0 %v201
    %228 = vmatprep.subr.mxu0 0.0
    %229 = vmatpush1.msra.mxu0 %v202
    %230 = vmatprep.subr.mxu0 0.0
    %231 = vmatpush1.msra.mxu0 %v203
    %232 = vmatprep.subr.mxu0 0.0
    %233 = vmatpush1.msra.mxu0 %v204
    %234 = vmatprep.subr.mxu0 0.0
    %235 = vmatpush1.msra.mxu0 %v205
    %236 = vmatprep.subr.mxu0 0.0
    %237 = vmatpush1.msra.mxu0 %v206
    %238 = vmatprep.subr.mxu0 0.0
    %239 = vmatpush1.msra.mxu0 %v207
    %240 = vmatprep.subr.mxu0 0.0
    %241 = vmatpush1.msra.mxu0 0.0
    %242 = vmatprep.subr.mxu0 0.0
    %243 = vmatpush1.msra.mxu0 0.0
    %244 = vmatprep.subr.mxu0 0.0
    %245 = vmatpush1.msra.mxu0 0.0
    %246 = vmatprep.subr.mxu0 0.0
    %247 = vmatpush1.msra.mxu0 0.0
    %248 = vmatprep.subr.mxu0 0.0
    %249 = vmatpush1.msra.mxu0 0.0
    %250 = vmatprep.subr.mxu0 0.0
    %251 = vmatpush1.msra.mxu0 0.0
    %252 = vmatprep.subr.mxu0 0.0
    %253 = vmatpush1.msra.mxu0 0.0
    %254 = vmatprep.subr.mxu0 0.0
    %255 = vmatpush1.msra.mxu0 0.0
    %256 = vmatprep.subr.mxu0 0.0
    %257 = vmatpush1.msra.mxu0 0.0
    %258 = vmatprep.subr.mxu0 0.0
    %259 = vmatpush1.msra.mxu0 0.0
    %260 = vmatprep.subr.mxu0 0.0
    %261 = vmatpush1.msra.mxu0 0.0
    %262 = vmatprep.subr.mxu0 0.0
    %263 = vmatpush1.msra.mxu0 0.0
    %264 = vmatprep.subr.mxu0 0.0
    %265 = vmatpush1.msra.mxu0 0.0
    %266 = vmatprep.subr.mxu0 0.0
    %267 = vmatpush1.msra.mxu0 0.0
    %268 = vmatprep.subr.mxu0 0.0
    %269 = vmatpush1.msra.mxu0 0.0
    %270 = vmatprep.subr.mxu0 0.0
    %271 = vmatpush1.msra.mxu0 0.0
    %272 = vmatprep.mubr.f32.mxu0 0.0
    %273 = vmatmul.mubr.f32.gmra.mrb[0].mxu0 %v190
    %v274 = vpop.f32.mrb[0].mxu0
    %v275 = vadd.f32 0.0, %v274
    %v276 = vpop.f32.mrb[0].mxu0
    %277 = vmatprep.mubr.f32.mxu0 0.0
    %278 = vmatmul.mubr.f32.gmra.mrb[0].mxu0 %v191
    %v279 = vpop.f32.mrb[0].mxu0
    %v280 = vadd.f32 0.0, %v279
    %v281 = vpop.f32.mrb[0].mxu0
    %282 = vdwg.mxu0
    %v283 = vmax.f32 %v275, 0.0
    %v284 = vmax.f32 %v280, 0.0
    %v285 = vld [vmem:[#allocation9] sm:$0xff]
    %v286 = vld [vmem:[#allocation9 + $0x8] sm:$0xff]
    %v287 = vld [vmem:[#allocation9 + $0x10] sm:$0xff]
    %v288 = vld [vmem:[#allocation9 + $0x18] sm:$0xff]
    %v289 = vld [vmem:[#allocation9 + $0x20] sm:$0xff]
    %v290 = vld [vmem:[#allocation9 + $0x28] sm:$0xff]
    %v291 = vld [vmem:[#allocation9 + $0x30] sm:$0xff]
    %v292 = vld [vmem:[#allocation9 + $0x38] sm:$0xff]
    %v293 = vld [vmem:[#allocation9 + $0x40] sm:$0xff]
    %v294 = vld [vmem:[#allocation9 + $0x48] sm:$0xff]
    %v295 = vld [vmem:[#allocation9 + $0x50] sm:$0xff]
    %v296 = vld [vmem:[#allocation9 + $0x58] sm:$0xff]
    %v297 = vld [vmem:[#allocation9 + $0x60] sm:$0xff]
    %v298 = vld [vmem:[#allocation9 + $0x68] sm:$0xff]
    %v299 = vld [vmem:[#allocation9 + $0x70] sm:$0xff]
    %v300 = vld [vmem:[#allocation9 + $0x78] sm:$0xff]
    %301 = vmatprep.subr.mxu0 0.0
    %302 = vmatpush1.msra.mxu0 %v285
    %303 = vmatprep.subr.mxu0 0.0
    %304 = vmatpush1.msra.mxu0 %v286
    %305 = vmatprep.subr.mxu0 0.0
    %306 = vmatpush1.msra.mxu0 %v287
    %307 = vmatprep.subr.mxu0 0.0
    %308 = vmatpush1.msra.mxu0 %v288
    %309 = vmatprep.subr.mxu0 0.0
    %310 = vmatpush1.msra.mxu0 %v289
    %311 = vmatprep.subr.mxu0 0.0
    %312 = vmatpush1.msra.mxu0 %v290
    %313 = vmatprep.subr.mxu0 0.0
    %314 = vmatpush1.msra.mxu0 %v291
    %315 = vmatprep.subr.mxu0 0.0
    %316 = vmatpush1.msra.mxu0 %v292
    %317 = vmatprep.subr.mxu0 0.0
    %318 = vmatpush1.msra.mxu0 %v293
    %319 = vmatprep.subr.mxu0 0.0
    %320 = vmatpush1.msra.mxu0 %v294
    %321 = vmatprep.subr.mxu0 0.0
    %322 = vmatpush1.msra.mxu0 %v295
    %323 = vmatprep.subr.mxu0 0.0
    %324 = vmatpush1.msra.mxu0 %v296
    %325 = vmatprep.subr.mxu0 0.0
    %326 = vmatpush1.msra.mxu0 %v297
    %327 = vmatprep.subr.mxu0 0.0
    %328 = vmatpush1.msra.mxu0 %v298
    %329 = vmatprep.subr.mxu0 0.0
    %330 = vmatpush1.msra.mxu0 %v299
    %331 = vmatprep.subr.mxu0 0.0
    %332 = vmatpush1.msra.mxu0 %v300
    %333 = vmatprep.subr.mxu0 0.0
    %334 = vmatpush1.msra.mxu0 0.0
    %335 = vmatprep.subr.mxu0 0.0
    %336 = vmatpush1.msra.mxu0 0.0
    %337 = vmatprep.subr.mxu0 0.0
    %338 = vmatpush1.msra.mxu0 0.0
    %339 = vmatprep.subr.mxu0 0.0
    %340 = vmatpush1.msra.mxu0 0.0
    %341 = vmatprep.subr.mxu0 0.0
    %342 = vmatpush1.msra.mxu0 0.0
    %343 = vmatprep.subr.mxu0 0.0
    %344 = vmatpush1.msra.mxu0 0.0
    %345 = vmatprep.subr.mxu0 0.0
    %346 = vmatpush1.msra.mxu0 0.0
    %347 = vmatprep.subr.mxu0 0.0
    %348 = vmatpush1.msra.mxu0 0.0
    %349 = vmatprep.subr.mxu0 0.0
    %350 = vmatpush1.msra.mxu0 0.0
    %351 = vmatprep.subr.mxu0 0.0
    %352 = vmatpush1.msra.mxu0 0.0
    %353 = vmatprep.subr.mxu0 0.0
    %354 = vmatpush1.msra.mxu0 0.0
    %355 = vmatprep.subr.mxu0 0.0
    %356 = vmatpush1.msra.mxu0 0.0
    %357 = vmatprep.subr.mxu0 0.0
    %358 = vmatpush1.msra.mxu0 0.0
    %359 = vmatprep.subr.mxu0 0.0
    %360 = vmatpush1.msra.mxu0 0.0
    %361 = vmatprep.subr.mxu0 0.0
    %362 = vmatpush1.msra.mxu0 0.0
    %363 = vmatprep.subr.mxu0 0.0
    %364 = vmatpush1.msra.mxu0 0.0
    %365 = vmatprep.mubr.f32.mxu0 0.0
    %366 = vmatmul.mubr.f32.gmra.mrb[0].mxu0 %v283
    %v367 = vpop.f32.mrb[0].mxu0
    %v368 = vadd.f32 0.0, %v367
    %v369 = vpop.f32.mrb[0].mxu0
    %370 = vmatprep.mubr.f32.mxu0 0.0
    %371 = vmatmul.mubr.f32.gmra.mrb[0].mxu0 %v284
    %v372 = vpop.f32.mrb[0].mxu0
    %v373 = vadd.f32 0.0, %v372
    %v374 = vpop.f32.mrb[0].mxu0
    %375 = vdwg.mxu0
    %v376 = vmax.f32 %v368, 0.0
    %v377 = vmax.f32 %v373, 0.0
    %v378 = vld [vmem:[#allocation11] sm:$0xff]
    %v379 = vld [vmem:[#allocation11 + $0x8] sm:$0xff]
    %v380 = vld [vmem:[#allocation11 + $0x10] sm:$0xff]
    %v381 = vld [vmem:[#allocation11 + $0x18] sm:$0xff]
    %v382 = vld [vmem:[#allocation11 + $0x20] sm:$0xff]
    %v383 = vld [vmem:[#allocation11 + $0x28] sm:$0xff]
    %v384 = vld [vmem:[#allocation11 + $0x30] sm:$0xff]
    %v385 = vld [vmem:[#allocation11 + $0x38] sm:$0xff]
    %v386 = vld [vmem:[#allocation11 + $0x40] sm:$0xff]
    %v387 = vld [vmem:[#allocation11 + $0x48] sm:$0xff]
    %v388 = vld [vmem:[#allocation11 + $0x50] sm:$0xff]
    %v389 = vld [vmem:[#allocation11 + $0x58] sm:$0xff]
    %v390 = vld [vmem:[#allocation11 + $0x60] sm:$0xff]
    %v391 = vld [vmem:[#allocation11 + $0x68] sm:$0xff]
    %v392 = vld [vmem:[#allocation11 + $0x70] sm:$0xff]
    %v393 = vld [vmem:[#allocation11 + $0x78] sm:$0xff]
    %v394 = vld [vmem:[%s5] sm:$0x1]
    %v396 = vlaneseq
    %v397 = vshrl.u32 %v396, 7
    %v398 = vsub.s32 0, %v397
    %v399 = vrot.slane %v394, %v398
    %401 = vmatprep.subr.mxu0 0.0
    %402 = vmatpush1.msra.mxu0 %v378
    %403 = vmatprep.subr.mxu0 0.0
    %404 = vmatpush1.msra.mxu0 %v379
    %405 = vmatprep.subr.mxu0 0.0
    %406 = vmatpush1.msra.mxu0 %v380
    %407 = vmatprep.subr.mxu0 0.0
    %408 = vmatpush1.msra.mxu0 %v381
    %409 = vmatprep.subr.mxu0 0.0
    %410 = vmatpush1.msra.mxu0 %v382
    %411 = vmatprep.subr.mxu0 0.0
    %412 = vmatpush1.msra.mxu0 %v383
    %413 = vmatprep.subr.mxu0 0.0
    %414 = vmatpush1.msra.mxu0 %v384
    %415 = vmatprep.subr.mxu0 0.0
    %416 = vmatpush1.msra.mxu0 %v385
    %417 = vmatprep.subr.mxu0 0.0
    %418 = vmatpush1.msra.mxu0 %v386
    %419 = vmatprep.subr.mxu0 0.0
    %420 = vmatpush1.msra.mxu0 %v387
    %421 = vmatprep.subr.mxu0 0.0
    %422 = vmatpush1.msra.mxu0 %v388
    %423 = vmatprep.subr.mxu0 0.0
    %424 = vmatpush1.msra.mxu0 %v389
    %425 = vmatprep.subr.mxu0 0.0
    %426 = vmatpush1.msra.mxu0 %v390
    %427 = vmatprep.subr.mxu0 0.0
    %428 = vmatpush1.msra.mxu0 %v391
    %429 = vmatprep.subr.mxu0 0.0
    %430 = vmatpush1.msra.mxu0 %v392
    %431 = vmatprep.subr.mxu0 0.0
    %432 = vmatpush1.msra.mxu0 %v393
    %433 = vmatprep.subr.mxu0 0.0
    %434 = vmatpush1.msra.mxu0 0.0
    %435 = vmatprep.subr.mxu0 0.0
    %436 = vmatpush1.msra.mxu0 0.0
    %437 = vmatprep.subr.mxu0 0.0
    %438 = vmatpush1.msra.mxu0 0.0
    %439 = vmatprep.subr.mxu0 0.0
    %440 = vmatpush1.msra.mxu0 0.0
    %441 = vmatprep.subr.mxu0 0.0
    %442 = vmatpush1.msra.mxu0 0.0
    %443 = vmatprep.subr.mxu0 0.0
    %444 = vmatpush1.msra.mxu0 0.0
    %445 = vmatprep.subr.mxu0 0.0
    %446 = vmatpush1.msra.mxu0 0.0
    %447 = vmatprep.subr.mxu0 0.0
    %448 = vmatpush1.msra.mxu0 0.0
    %449 = vmatprep.subr.mxu0 0.0
    %450 = vmatpush1.msra.mxu0 0.0
    %451 = vmatprep.subr.mxu0 0.0
    %452 = vmatpush1.msra.mxu0 0.0
    %453 = vmatprep.subr.mxu0 0.0
    %454 = vmatpush1.msra.mxu0 0.0
    %455 = vmatprep.subr.mxu0 0.0
    %456 = vmatpush1.msra.mxu0 0.0
    %457 = vmatprep.subr.mxu0 0.0
    %458 = vmatpush1.msra.mxu0 0.0
    %459 = vmatprep.subr.mxu0 0.0
    %460 = vmatpush1.msra.mxu0 0.0
    %461 = vmatprep.subr.mxu0 0.0
    %462 = vmatpush1.msra.mxu0 0.0
    %463 = vmatprep.subr.mxu0 0.0
    %464 = vmatpush1.msra.mxu0 0.0
    %465 = vmatprep.mubr.f32.mxu0 0.0
    %466 = vmatmul.mubr.f32.gmra.mrb[0].mxu0 %v376
    %v467 = vpop.f32.mrb[0].mxu0
    %v468 = vadd.f32 %v399, %v467
    %v469 = vpop.f32.mrb[0].mxu0
    %470 = vmatprep.mubr.f32.mxu0 0.0
    %471 = vmatmul.mubr.f32.gmra.mrb[0].mxu0 %v377
    %v472 = vpop.f32.mrb[0].mxu0
    %v473 = vadd.f32 %v399, %v472
    %v474 = vpop.f32.mrb[0].mxu0
    %475 = vdwg.mxu0
    %v476 = vxor.u32 %v468, 2147483648
    %v477 = vxor.u32 %v473, 2147483648
    %v478 = vmul.f32 %v476, 1.442695
    %v479 = vpow.pop %v478
    %v480 = vmul.f32 %v477, 1.442695
    %v481 = vpow.pop %v480
    %v482 = vadd.f32 %v479, 1.0
    %v483 = vadd.f32 %v481, 1.0
    %v484 = vrcp.pop %v482
    %v485 = vmul.f32 1.0, %v484
    %v486 = vrcp.pop %v483
    %v487 = vmul.f32 1.0, %v486
    %v488 = vld [vmem:[#allocation2] sm:$0x3]
    %v489 = vrot.slane %v485, 4
    %v490 = vadd.f32 %v485, %v489
    %v491 = vrot.slane %v490, 2
    %v492 = vadd.f32 %v490, %v491
    %v493 = vrot.slane %v492, 1
    %v494 = vadd.f32 %v492, %v493
    %v495 = vrot.slane %v487, 4
    %v496 = vadd.f32 %v487, %v495
    %v497 = vrot.slane %v496, 2
    %v498 = vadd.f32 %v496, %v497
    %v499 = vrot.slane %v498, 1
    %v500 = vadd.f32 %v498, %v499
    %vm503 = vcmask 1041409
    %v504 = vsel %vm503, %v500, %v494
    %v506 = vadd.f32 %v488, %v504
    %507 = vst [vmem:[#allocation2] sm:$0x3] %v506
    // Predicated region
    $region50: #{tpu_custom_call.1} parent=1 // pred_check
      %p508 = pneg %p92
    $region51: #{tpu_custom_call.1} parent=1 // pred_check_branch
      %510 = sbr.rel (%p508) target = $region53
    $region52: #{tpu_custom_call.1} parent=1 // pred_region
      %v511 = vld [vmem:[#allocation2] sm:$0x3]
      %v512 = vmul.f32 %v511, 0.125
      %513 = vst [vmem:[#allocation12] sm:$0x3] %v512
    $region53: #{tpu_custom_call.1} parent=1 // pred_fallthru
      _
    // Predicated region
    $region54: #{tpu_custom_call.1} parent=1 // pred_check
      _
    $region55: #{tpu_custom_call.1} parent=1 // pred_check_branch
      %515 = sbr.rel (0) target = $region57
    $region56: #{tpu_custom_call.1} parent=1 // pred_region
      %s517 = ssub.s32 32, 32
      %518 = vsyncadd [#allocation5], %s517
      %s520 = sshll.u32 [#allocation12], 4
      %s521 = int_to_ptr.vmem [resolvable:$true] %s520
      %523 = dma.vmem_to_hbm [thread:$0]  %s521, 32, %s6, [#allocation5]
    $region57: #{tpu_custom_call.1} parent=1 // pred_fallthru
      _
    // Predicated region
    $region58: #{tpu_custom_call.1} parent=1 // pred_check
      _
    $region59: #{tpu_custom_call.1} parent=1 // pred_check_branch
      %525 = sbr.rel (0) target = $region61
    $region60: #{tpu_custom_call.1} parent=1 // pred_region
      %526 = dma.done [#allocation5], 32
    $region61: #{tpu_custom_call.1} parent=1 // pred_fallthru
      _
    %527 = vsyncpa [#allocation4], 1
    %528 = vsyncpa [#allocation7], 1
    %529 = vsyncpa [#allocation10], 1
    %530 = vsyncpa [#allocation5], 1

</llo_original>
